<compile_context>
chip_gen: v5e
topology: v5e:2x2
jax: 0.10.0
libtpu: 0.0.40
codegen_flags: <defaults>
</compile_context>

<pallas_src>
import math
import functools

import jax
import jax.numpy as jnp
from jax import lax
from jax.experimental import pallas as pl
from jax.experimental.pallas import tpu as pltpu


# ----------------------------------------------------------------------------
# Kernel
# ----------------------------------------------------------------------------
def _pos_encoding_kernel(seed_ref, x_ref, pe_ref, o_ref, *, batch, p_drop, train):
    # seed_ref: (1,) int32 scalar-prefetch operand (SMEM)
    # x_ref   : (tile_s*batch, D) VMEM tile of the flattened (S*B, D) input
    # pe_ref  : (tile_s, D)       VMEM tile of the dense (L, D) pe table
    rows, d = x_ref.shape
    tile_s = rows // batch

    x = x_ref[...]
    pe = pe_ref[...]
    if batch == 1:
        y = x + pe
    else:
        # Each pe row applies to `batch` consecutive flattened rows.
        pe_b = jnp.broadcast_to(pe[:, None, :], (tile_s, batch, d)).reshape(rows, d)
        y = x + pe_b

    if train and p_drop > 0.0:
        if p_drop >= 1.0:
            y = jnp.zeros_like(y)
        else:
            # Inverted dropout with a counter-based PRNG: lowbias32 hash of the
            # global flattened element index mixed with the runtime seed.
            # Unsigned compare: P(keep) = 1 - p for uniform 32-bit output.
            row0 = pl.program_id(0) * rows
            gid = (lax.broadcasted_iota(jnp.int32, (rows, d), 0) + row0) * d \
                  + lax.broadcasted_iota(jnp.int32, (rows, d), 1)
            u = gid.astype(jnp.uint32) + \
                seed_ref[0].astype(jnp.uint32) * jnp.uint32(0x9E3779B9)
            u = (u ^ (u >> 16)) * jnp.uint32(0x7FEB352D)
            u = (u ^ (u >> 15)) * jnp.uint32(0x846CA68B)
            u = u ^ (u >> 16)
            thresh = jnp.uint32(min(int(round(p_drop * 2.0**32)), 2**32 - 1))
            keep = u >= thresh
            scale = jnp.asarray(1.0 / (1.0 - p_drop), dtype=y.dtype)
            y = jnp.where(keep, y * scale, jnp.zeros_like(y))

    o_ref[...] = y.astype(o_ref.dtype)


# ----------------------------------------------------------------------------
# Parameter setup (buffer `pe`, computed deterministically in-script)
# ----------------------------------------------------------------------------
def make_pe_table(d_model, max_len=5000, dtype=jnp.float32):
    """Dense 2-D positional-encoding table of shape (max_len, d_model)."""
    position = jnp.arange(0, max_len, dtype=jnp.float32)[:, None]          # (L, 1)
    div_term = jnp.exp(
        jnp.arange(0, d_model, 2, dtype=jnp.float32)
        * (-math.log(10000.0) / d_model)
    )                                                                       # (D/2,)
    ang = position * div_term                                               # (L, D/2)
    pe = jnp.zeros((max_len, d_model), dtype=jnp.float32)
    pe = pe.at[:, 0::2].set(jnp.sin(ang))
    pe = pe.at[:, 1::2].set(jnp.cos(ang))
    return pe.astype(dtype)                                                 # (L, D)


# ----------------------------------------------------------------------------
# Wrapper
# ----------------------------------------------------------------------------
def _vmem_tile_budget_bytes():
    """Double-buffered working-set budget (x + out + pe tiles), per generation."""
    try:
        kind = jax.devices()[0].device_kind.lower()
    except Exception:
        kind = ""
    if "v5 lite" in kind or "v5e" in kind:
        return 10 << 20      # 0.82 TB/s HBM: per-step overhead already small
    if "v6" in kind:
        return 20 << 20      # 1.4 TB/s
    if "v7" in kind or "7x" in kind:
        return 28 << 20      # 3.2 TB/s: big tiles amortize per-step overhead
    return 12 << 20          # unknown / CPU interpret: conservative default


def _pick_tile_s(S, B, D, itemsize, budget_bytes):
    """Largest 8-aligned sequence tile whose double-buffered footprint fits."""
    step_bytes_per_row = (2 * B + 1) * D * itemsize   # x + out + pe per seq row
    t = int(budget_bytes // (2 * step_bytes_per_row)) # /2: Pallas double-buffers
    if t >= S:
        return S
    if t >= 8:
        return t - (t % 8)
    return min(8, S)


def positional_encoding(x, pe_table, *, dropout=0.1, train=False, seed=0, tile_s=None):
    """x: (seq_len, batch, d_model); pe_table: (max_len, d_model).

    Returns dropout(x + pe[:seq_len]) with nn.Dropout (inverted) semantics.
    """
    S, B, D = x.shape
    L, Dp = pe_table.shape
    assert Dp == D and L >= S, "pe table too short / wrong shape"

    pe = pe_table
    if pe.dtype != x.dtype:
        # Slice BEFORE casting: convert only the S rows used, not all max_len.
        pe = pe[:S].astype(x.dtype)

    itemsize = jnp.dtype(x.dtype).itemsize
    if tile_s is None:
        tile_s = _pick_tile_s(S, B, D, itemsize, _vmem_tile_budget_bytes())
    tile_s = int(min(max(1, int(tile_s)), S))
    if tile_s < S and tile_s % 8 != 0:
        tile_s = min(S, max(8, tile_s - tile_s % 8))
    if tile_s == S and S % 8 != 0 and pe.shape[0] != S:
        # Single unaligned tile: make the pe block equal the full array dims.
        pe = pe[:S]

    grid = (pl.cdiv(S, tile_s),)
    rows = tile_s * B

    # Free row-major view: keeps both minor block dims dense for any batch size.
    x2 = x.reshape(S * B, D)

    seed_arr = jnp.asarray(seed, dtype=jnp.int32).reshape((1,))
    kernel = functools.partial(
        _pos_encoding_kernel, batch=B, p_drop=float(dropout), train=bool(train)
    )

    # Note: input_output_aliases={1: 0} (alias x -> out) would drop the extra
    # S*B*D output allocation, but only pays off when the caller donates x at
    # the jit boundary; otherwise XLA inserts a full copy. Left off here.
    out2 = pl.pallas_call(
        kernel,
        out_shape=jax.ShapeDtypeStruct((S * B, D), x.dtype),
        grid_spec=pltpu.PrefetchScalarGridSpec(
            num_scalar_prefetch=1,
            grid=grid,
            in_specs=[
                pl.BlockSpec((rows, D), lambda i, seed: (i, 0)),
                pl.BlockSpec((tile_s, D), lambda i, seed: (i, 0)),
            ],
            out_specs=pl.BlockSpec((rows, D), lambda i, seed: (i, 0)),
        ),
        compiler_params=pltpu.CompilerParams(
            dimension_semantics=("parallel",),
            vmem_limit_bytes=56 << 20,
        ),
    )(seed_arr, x2, pe)
    return out2.reshape(S, B, D)


# ----------------------------------------------------------------------------
# Demo / self-check
# ----------------------------------------------------------------------------
if __name__ == "__main__":
    import numpy as np

    d_model, max_len = 128, 5000          # lane-dense d_model (multiple of 128)
    pe_table = make_pe_table(d_model, max_len=max_len, dtype=jnp.float32)   # (L, D)

    key = jax.random.PRNGKey(0)
    k1, k2 = jax.random.split(key)

    # --- Eval-mode forward (dropout is identity), single tile ---------------
    S1, B1 = 8, 2
    x1 = jax.random.normal(k1, (S1, B1, d_model), dtype=jnp.float32)
    out1 = jax.block_until_ready(
        positional_encoding(x1, pe_table, dropout=0.1, train=False))
    ref1 = x1 + pe_table[:S1][:, None, :]
    assert out1.shape == (S1, B1, d_model)
    assert jnp.allclose(out1, ref1, atol=1e-6, rtol=1e-6), "eval mismatch vs reference"

    # --- Eval-mode, multi-step grid over the sequence axis ------------------
    S2, B2, tS = 32, 2, 8                 # grid = (4,)
    x2 = jax.random.normal(k2, (S2, B2, d_model), dtype=jnp.float32)
    out2 = jax.block_until_ready(
        positional_encoding(x2, pe_table, dropout=0.1, train=False, tile_s=tS))
    ref2 = x2 + pe_table[:S2][:, None, :]
    assert jnp.allclose(out2, ref2, atol=1e-6, rtol=1e-6), "gridded eval mismatch"

    # --- Train-mode forward: inverted dropout (nn.Dropout semantics) --------
    # The RNG stream cannot bit-match torch; check structural properties.
    p = 0.1
    out3 = jax.block_until_ready(
        positional_encoding(x2, pe_table, dropout=p, train=True, seed=123, tile_s=tS))
    out3_np = np.asarray(out3)
    scaled_np = np.asarray(ref2) / (1.0 - p)
    is_zero = np.abs(out3_np) <= 1e-6
    is_scaled = np.abs(out3_np - scaled_np) <= 1e-4 * (1.0 + np.abs(scaled_np))
    assert np.all(is_zero | is_scaled), "dropout output is neither 0 nor scaled(x+pe)"
    drop_frac = float(is_zero.mean())
    assert 0.02 <= drop_frac <= 0.25, f"dropout fraction {drop_frac} far from p={p}"
    # Masks are keyed on the global element index: different tiles must differ.
    assert not np.array_equal(is_zero[:tS], is_zero[tS:2 * tS]), "identical masks across tiles"

    print("KERNEL_OK")
</pallas_src>

<mosaic_0001>
module attributes {stable_mosaic.version = 11 : i64} {
  func.func @_pos_encoding_kernel(%arg0: i32, %arg1: memref<1xi32, #tpu.memory_space<smem>>, %arg2: memref<16x128xf32, #tpu.memory_space<vmem>>, %arg3: memref<8x128xf32, #tpu.memory_space<vmem>>, %arg4: memref<16x128xf32, #tpu.memory_space<vmem>>) attributes {dimension_semantics = [#tpu.dimension_semantics<parallel>], iteration_bounds = array<i64: 1>, scalar_prefetch = 1 : i64, scratch_operands = 0 : i64, tpu.core_type = #tpu.core_type<tc>, window_params = [{transform_indices = @transform_0, window_bounds = array<i64: 16, 128>}, {transform_indices = @transform_1, window_bounds = array<i64: 8, 128>}, {transform_indices = @transform_2, window_bounds = array<i64: 16, 128>}]} {
    %c0 = arith.constant 0 : index
    %c0_0 = arith.constant 0 : index
    %0 = vector.load %arg2[%c0, %c0_0] : memref<16x128xf32, #tpu.memory_space<vmem>>, vector<16x128xf32>
    %c0_1 = arith.constant 0 : index
    %c0_2 = arith.constant 0 : index
    %1 = vector.load %arg3[%c0_1, %c0_2] : memref<8x128xf32, #tpu.memory_space<vmem>>, vector<8x128xf32>
    %2 = vector.shape_cast %1 : vector<8x128xf32> to vector<8x1x128xf32>
    %3 = vector.shape_cast %2 : vector<8x1x128xf32> to vector<8x1x128xf32>
    %4 = vector.broadcast %3 : vector<8x1x128xf32> to vector<8x2x128xf32>
    %5 = vector.shape_cast %4 : vector<8x2x128xf32> to vector<16x128xf32>
    %6 = arith.addf %0, %5 : vector<16x128xf32>
    %c0_3 = arith.constant 0 : index
    %c0_4 = arith.constant 0 : index
    %7 = vector.load %arg4[%c0_3, %c0_4] : memref<16x128xf32, #tpu.memory_space<vmem>>, vector<16x128xf32>
    tpu.vector_store %arg4[%c0_3, %c0_4], %6 {strides = array<i32>} : memref<16x128xf32, #tpu.memory_space<vmem>>, vector<16x128xf32>,
    return
  }
  func.func @transform_0(%arg0: i32, %arg1: memref<1xi32, #tpu.memory_space<smem>>) -> (i32, i32) {
    %c0_i32 = arith.constant 0 : i32
    %c0_i32_0 = arith.constant 0 : i32
    return %arg0, %c0_i32 : i32, i32
  }
  func.func @transform_1(%arg0: i32, %arg1: memref<1xi32, #tpu.memory_space<smem>>) -> (i32, i32) {
    %c0_i32 = arith.constant 0 : i32
    %c0_i32_0 = arith.constant 0 : i32
    return %arg0, %c0_i32 : i32, i32
  }
  func.func @transform_2(%arg0: i32, %arg1: memref<1xi32, #tpu.memory_space<smem>>) -> (i32, i32) {
    %c0_i32 = arith.constant 0 : i32
    %c0_i32_0 = arith.constant 0 : i32
    return %arg0, %c0_i32 : i32, i32
  }
}

</mosaic_0001>

<llo_original>
// kernel: tpu_custom_call.1
$region0: #{tpu_custom_call.1}
  #allocation0 [shape = 'u32[]', space=smem, size = 0x4, offset = 0x4, fixed_abs, tag = 'smem constant byte address 0x4 - core index']
  #allocation1 [shape = 'u32[72,128]{1,0:T(1,128)}', space=vmem, size = 0x9000, scoped, tag = 'internal scratch']
  #allocation2 [shape = 's32[1]{0}', space=sflag, size = 0x4, scoped, tag = 'scoped memory for tpu_custom_call.1']
  #allocation3 [shape = 's32[1]{0:T(128)S(6)}', space=smem, size = 0x200, scoped, tag = 'prefetched SMEM operand 0']
  %s0 = inlined_call_operand.<no memory space> [shape: s32[1], index: 0, kind: input, shape index: {}]
  %s1 = inlined_call_operand.hbm [shape: f32[16,128], index: 1, kind: input, shape index: {}]
  %s2 = inlined_call_operand.hbm [shape: f32[5000,128], index: 2, kind: input, shape index: {}]
  %s3 = inlined_call_operand.hbm [shape: f32[16,128], index: 3, kind: output, shape index: {}]
  %s4 = sld [smem:[#allocation0]]
  $region26: #{tpu_custom_call.1} parent=0
    _
  %s6 = ssub.s32 1, %s4
  %s7 = scalar_select 0, %s6, %s4
  %8 = sst [smem:[#allocation3]] %s0
  $region1: #{tpu_custom_call.1} parent=0
    #allocation4 [shape = 'u8[8192]{0}', space=vmem, size = 0x2000, scoped, tag = 'input window, operand 1, single buffered']
    #allocation5 [shape = 's32[1]{0}', space=sflag, size = 0x4, scoped, tag = 'scoped memory for tpu_custom_call.1']
    #allocation6 [shape = 's32[1]{0}', space=sflag, size = 0x4, scoped, tag = 'scoped memory for tpu_custom_call.1']
    #allocation7 [shape = 'u8[4096]{0}', space=vmem, size = 0x1000, scoped, tag = 'input window, operand 2, single buffered']
    #allocation8 [shape = 's32[1]{0}', space=sflag, size = 0x4, scoped, tag = 'scoped memory for tpu_custom_call.1']
    #allocation9 [shape = 'u8[8192]{0}', space=vmem, size = 0x2000, scoped, tag = 'output window, operand 0, single buffered']
    %9 = vsyncpa [#allocation5], 0
    %10 = vsyncpa [#allocation8], 0
    %11 = vsyncpa [#allocation6], 0
    // Predicated region
    $region2: #{tpu_custom_call.1} parent=1 // pred_check
      _
    $region3: #{tpu_custom_call.1} parent=1 // pred_check_branch
      %13 = sbr.rel (0) target = $region5
    $region4: #{tpu_custom_call.1} parent=1 // pred_region
      %15 = vsyncadd [#allocation5], 0
      %s16 = sshll.u32 %s1, 4
      %s17 = int_to_ptr.hbm [resolvable:$true] %s16
      %s18 = sshll.u32 [#allocation4], 4
      %s19 = int_to_ptr.vmem [resolvable:$true] %s18
      %24 = dma.hbm_to_vmem [thread:$0]  %s17, 256, %s19, [#allocation5], 128, 128, 8
    $region5: #{tpu_custom_call.1} parent=1 // pred_fallthru
      _
    // Predicated region
    $region6: #{tpu_custom_call.1} parent=1 // pred_check
      _
    $region7: #{tpu_custom_call.1} parent=1 // pred_check_branch
      %26 = sbr.rel (0) target = $region9
    $region8: #{tpu_custom_call.1} parent=1 // pred_region
      %28 = vsyncadd [#allocation8], 0
      %s30 = sshll.u32 %s2, 4
      %s31 = int_to_ptr.hbm [resolvable:$true] %s30
      %s32 = sshll.u32 [#allocation7], 4
      %s33 = int_to_ptr.vmem [resolvable:$true] %s32
      %35 = dma.hbm_to_vmem [thread:$0]  %s31, 128, %s33, [#allocation8]
    $region9: #{tpu_custom_call.1} parent=1 // pred_fallthru
      _
    // Predicated region
    $region10: #{tpu_custom_call.1} parent=1 // pred_check
      _
    $region11: #{tpu_custom_call.1} parent=1 // pred_check_branch
      %37 = sbr.rel (0) target = $region13
    $region12: #{tpu_custom_call.1} parent=1 // pred_region
      %39 = dma.done [#allocation5], 256
    $region13: #{tpu_custom_call.1} parent=1 // pred_fallthru
      _
    // Predicated region
    $region14: #{tpu_custom_call.1} parent=1 // pred_check
      _
    $region15: #{tpu_custom_call.1} parent=1 // pred_check_branch
      %41 = sbr.rel (0) target = $region17
    $region16: #{tpu_custom_call.1} parent=1 // pred_region
      %43 = dma.done [#allocation8], 128
    $region17: #{tpu_custom_call.1} parent=1 // pred_fallthru
      _
    %v44 = vld [vmem:[#allocation4] sm:$0xff]
    %v45 = vld [vmem:[#allocation4 + $0x8] sm:$0xff]
    %v46 = vld [vmem:[#allocation7] sm:$0xff]
    %v48 = vrot.slane %v46, 1
    %v49 = vrot.slane %v46, 2
    %v50 = vrot.slane %v46, 3
    %v51 = vrot.slane %v46, 4
    %v52 = vrot.slane %v46, 5
    %v53 = vrot.slane %v46, 6
    %v54 = vrot.slane %v46, 7
    %v55 = vperm.slane %v46, 0
    %v56 = vperm.slane %v48, 0
    %v57 = vperm.slane %v49, 0
    %v58 = vperm.slane %v50, 0
    %v59 = vperm.slane %v51, 0
    %v60 = vperm.slane %v52, 0
    %v61 = vperm.slane %v53, 0
    %v62 = vperm.slane %v54, 0
    %63 = vst [vmem:[#allocation1] ss:$4 sm:$0xff] %v55
    %s64 = scalar_lea.vmem [#allocation1], 1
    %65 = vst [vmem:[%s64] ss:$4 sm:$0xff] %v56
    %s66 = scalar_lea.vmem [#allocation1], 2
    %67 = vst [vmem:[%s66] ss:$4 sm:$0xff] %v57
    %s68 = scalar_lea.vmem [#allocation1], 3
    %69 = vst [vmem:[%s68] ss:$4 sm:$0xff] %v58
    %s70 = scalar_lea.vmem [#allocation1], 32
    %71 = vst [vmem:[%s70] ss:$4 sm:$0xff] %v59
    %s72 = scalar_lea.vmem [#allocation1], 33
    %73 = vst [vmem:[%s72] ss:$4 sm:$0xff] %v60
    %s74 = scalar_lea.vmem [#allocation1], 34
    %75 = vst [vmem:[%s74] ss:$4 sm:$0xff] %v61
    %s76 = scalar_lea.vmem [#allocation1], 35
    %77 = vst [vmem:[%s76] ss:$4 sm:$0xff] %v62
    %v78 = vld.sshfl [vmem:[#allocation1] sm:$0xff pattern:$0x73625140]
    %v79 = vld.sshfl [vmem:[#allocation1 + $0x20] sm:$0xff pattern:$0x73625140]
    %v82 = vadd.f32 %v44, %v78
    %v83 = vadd.f32 %v45, %v79
    %84 = vst [vmem:[#allocation9] sm:$0xff] %v82
    %85 = vst [vmem:[#allocation9 + $0x8] sm:$0xff] %v83
    // Predicated region
    $region18: #{tpu_custom_call.1} parent=1 // pred_check
      _
    $region19: #{tpu_custom_call.1} parent=1 // pred_check_branch
      %87 = sbr.rel (0) target = $region21
    $region20: #{tpu_custom_call.1} parent=1 // pred_region
      %89 = vsyncadd [#allocation6], 0
      %s90 = sshll.u32 [#allocation9], 4
      %s91 = int_to_ptr.vmem [resolvable:$true] %s90
      %s92 = sshll.u32 %s3, 4
      %s93 = int_to_ptr.hbm [resolvable:$true] %s92
      %98 = dma.vmem_to_hbm [thread:$0]  %s91, 256, %s93, [#allocation6], 128, 128, 8
    $region21: #{tpu_custom_call.1} parent=1 // pred_fallthru
      _
    // Predicated region
    $region22: #{tpu_custom_call.1} parent=1 // pred_check
      _
    $region23: #{tpu_custom_call.1} parent=1 // pred_check_branch
      %100 = sbr.rel (0) target = $region25
    $region24: #{tpu_custom_call.1} parent=1 // pred_region
      %102 = dma.done [#allocation6], 256
    $region25: #{tpu_custom_call.1} parent=1 // pred_fallthru
      _
    %103 = vsyncpa [#allocation5], 1
    %104 = vsyncpa [#allocation8], 1
    %105 = vsyncpa [#allocation6], 1

</llo_original>
